<compile_context>
chip_gen: v7x
topology: tpu7x:2x2x1
jax: 0.10.0
libtpu: 0.0.40
codegen_flags: <defaults>
</compile_context>

<pallas_src>
import jax
import jax.numpy as jnp
from jax import lax
from jax.experimental import pallas as pl
from jax.experimental.pallas import tpu as pltpu


def _critic_kernel(x_ref, w1_ref, b1_ref, w2_ref, b2_ref, o_ref):
    """One batch tile: x (TB, D) -> o (1, TB) lane-dense row of critic values."""
    w1 = w1_ref[...]                                  # (D, H), bf16 (or f32)
    x = x_ref[...].astype(w1.dtype)                   # cast x to the weight dtype
    # Layer 1 on the MXU, f32 accumulation.
    h = jnp.dot(x, w1, preferred_element_type=jnp.float32)        # (TB, H) f32
    h = jnp.maximum(h + b1_ref[...], 0.0)                         # bias + ReLU (VPU)

    # Layer 2 (H -> 1), lane-dense: contract H of w2 (1, H) with H of h (TB, H)
    # -> (1, TB) row on the MXU (same q@k.T-style contraction used by attention).
    w2 = w2_ref[...]                                               # (1, H)
    out = lax.dot_general(
        w2, h.astype(w2.dtype),
        dimension_numbers=(((1,), (1,)), ((), ())),
        preferred_element_type=jnp.float32,
    )                                                              # (1, TB) f32
    o_ref[...] = (out + b2_ref[0]).astype(o_ref.dtype)             # scalar bias (SMEM)


def _round_up(x, m):
    return ((x + m - 1) // m) * m


def critic_forward(state, w1, b1, w2, b2, *, max_tile_b=4096, small_batch_max=1024):
    """state: (B, D). w1: (D, H), b1: (1, H), w2: (1, H), b2: (1,).
    Returns (B, 1) f32, matching PyTorch's Critic output (bf16 matmul operands,
    f32 accumulation when the weights are stored as bf16)."""
    B, D = state.shape
    H = w1.shape[1]

    if B <= small_batch_max:
        # Grid-less single-block path: no pipeline machinery, one DMA per operand.
        # NOTE: in this regime the pallas_call launch + weight DMA dominates;
        # amortize across calls (batch requests) rather than tuning in-kernel.
        out_row = pl.pallas_call(
            _critic_kernel,
            out_shape=jax.ShapeDtypeStruct((1, B), jnp.float32),
            in_specs=[
                pl.BlockSpec(memory_space=pltpu.MemorySpace.VMEM),   # x
                pl.BlockSpec(memory_space=pltpu.MemorySpace.VMEM),   # w1
                pl.BlockSpec(memory_space=pltpu.MemorySpace.VMEM),   # b1
                pl.BlockSpec(memory_space=pltpu.MemorySpace.VMEM),   # w2
                pl.BlockSpec(memory_space=pltpu.MemorySpace.SMEM),   # b2 scalar
            ],
            out_specs=pl.BlockSpec(memory_space=pltpu.MemorySpace.VMEM),
        )(state, w1, b1, w2, b2)
        return out_row.reshape(B, 1)

    # Batched path: tile the batch axis with large tiles; keep >= 2 tiles so the
    # "parallel" axis can split across v7x's two TensorCores.  Tiles are a
    # multiple of 256 rows (lane-dense output rows, sublane-aligned x tiles).
    tb = min(max_tile_b, _round_up(pl.cdiv(B, 2), 256))
    n_tiles = pl.cdiv(B, tb)

    out = pl.pallas_call(
        _critic_kernel,
        out_shape=jax.ShapeDtypeStruct((n_tiles, tb), jnp.float32),
        grid=(n_tiles,),
        in_specs=[
            # Ragged last tile is fine: out-of-bounds rows are undefined but
            # row-local, and their outputs are sliced off below (no jnp.pad,
            # no extra HBM pass over x).
            pl.BlockSpec((tb, D), lambda i: (i, 0)),                 # x tile
            pl.BlockSpec((D, H), lambda i: (0, 0)),                  # w1 resident
            pl.BlockSpec((1, H), lambda i: (0, 0)),                  # b1 resident
            pl.BlockSpec((1, H), lambda i: (0, 0)),                  # w2 resident
            pl.BlockSpec(memory_space=pltpu.MemorySpace.SMEM),       # b2 scalar
        ],
        # Lane-dense (1, tb) output row per grid step (no lane-width-1 column).
        out_specs=pl.BlockSpec((1, tb), lambda i: (i, 0)),
        compiler_params=pltpu.CompilerParams(
            dimension_semantics=("parallel",),        # v7x: shard batch over 2 TCs
            vmem_limit_bytes=32 * 1024 * 1024,        # conservative for v7x (64 MiB)
        ),
    )(state, w1, b1, w2, b2)

    # Only the tiny (n_tiles*tb,) output is reshaped/sliced -- negligible traffic.
    return out.reshape(n_tiles * tb, 1)[:B]


def init_critic_params(key, input_dim, hidden_dim=128, dtype=jnp.bfloat16):
    """Kaiming-normal init (std = sqrt(2 / fan_in), matching
    nn.init.kaiming_normal_ defaults up to RNG); biases zero.
    Weights are stored in `dtype` (bf16 by default: MXU-native on v5e/v6e/v7x,
    f32 accumulation in-kernel keeps drift small).  Biases stay f32."""
    k1, k2 = jax.random.split(key)
    std1 = jnp.sqrt(2.0 / input_dim)
    std2 = jnp.sqrt(2.0 / hidden_dim)
    w1 = (jax.random.normal(k1, (input_dim, hidden_dim), jnp.float32) * std1).astype(dtype)
    b1 = jnp.zeros((1, hidden_dim), jnp.float32)
    w2 = (jax.random.normal(k2, (1, hidden_dim), jnp.float32) * std2).astype(dtype)
    b2 = jnp.zeros((1,), jnp.float32)
    return w1, b1, w2, b2


def _reference_f32(state, w1, b1, w2, b2):
    """Pure-f32 reference (the PyTorch module's math)."""
    h = jnp.maximum(state.astype(jnp.float32) @ w1.astype(jnp.float32) + b1, 0.0)
    return h @ w2.astype(jnp.float32).T + b2.reshape(1, 1)


def _reference_matched(state, w1, b1, w2, b2):
    """Reference with the same bf16-operand / f32-accumulate casts as the kernel."""
    h = jnp.dot(state.astype(w1.dtype), w1, preferred_element_type=jnp.float32)
    h = jnp.maximum(h + b1, 0.0)
    out = jnp.dot(h.astype(w2.dtype), w2.T, preferred_element_type=jnp.float32)
    return out + b2.reshape(1, 1)


if __name__ == "__main__":
    key = jax.random.PRNGKey(0)
    k_param, k_small, k_big = jax.random.split(key, 3)

    input_dim = 32
    hidden_dim = 128
    w1, b1, w2, b2 = init_critic_params(k_param, input_dim, hidden_dim)

    # --- small batch: grid-less single-block path ---
    batch = 8
    state = jax.random.normal(k_small, (batch, input_dim), jnp.float32)
    out = jax.block_until_ready(critic_forward(state, w1, b1, w2, b2))
    assert out.shape == (batch, 1)
    assert jnp.allclose(out, _reference_matched(state, w1, b1, w2, b2),
                        atol=1e-3, rtol=1e-3)
    assert jnp.allclose(out, _reference_f32(state, w1, b1, w2, b2),
                        atol=1e-1, rtol=1e-1)   # bf16-operand drift vs pure f32

    # --- larger batch: batch-tiled grid path (>=2 tiles, ragged last x tile,
    #     lane-dense output rows) ---
    big_batch = 2600   # > small_batch_max, not a multiple of the tile size
    state_big = jax.random.normal(k_big, (big_batch, input_dim), jnp.float32)
    out_big = jax.block_until_ready(critic_forward(state_big, w1, b1, w2, b2))
    assert out_big.shape == (big_batch, 1)
    assert jnp.allclose(out_big, _reference_matched(state_big, w1, b1, w2, b2),
                        atol=1e-3, rtol=1e-3)
    assert jnp.allclose(out_big, _reference_f32(state_big, w1, b1, w2, b2),
                        atol=1e-1, rtol=1e-1)

    print("KERNEL_OK")
</pallas_src>

<mosaic_0001>
module attributes {stable_mosaic.version = 11 : i64} {
  func.func @_critic_kernel(%arg0: memref<8x32xf32, #tpu.memory_space<vmem>>, %arg1: memref<32x128xbf16, #tpu.memory_space<vmem>>, %arg2: memref<1x128xf32, #tpu.memory_space<vmem>>, %arg3: memref<1x128xbf16, #tpu.memory_space<vmem>>, %arg4: memref<1xf32, #tpu.memory_space<smem>>, %arg5: memref<1x8xf32, #tpu.memory_space<vmem>>) attributes {dimension_semantics = [], scalar_prefetch = 0 : i64, scratch_operands = 0 : i64, tpu.core_type = #tpu.core_type<tc>} {
    %c0 = arith.constant 0 : index
    %c0_0 = arith.constant 0 : index
    %0 = vector.load %arg1[%c0, %c0_0] : memref<32x128xbf16, #tpu.memory_space<vmem>>, vector<32x128xbf16>
    %c0_1 = arith.constant 0 : index
    %c0_2 = arith.constant 0 : index
    %1 = vector.load %arg0[%c0_1, %c0_2] : memref<8x32xf32, #tpu.memory_space<vmem>>, vector<8x32xf32>
    %2 = arith.truncf %1 : vector<8x32xf32> to vector<8x32xbf16>
    %cst = arith.constant dense<0.000000e+00> : vector<8x128xf32>
    %3 = tpu.matmul %2, %0, %cst {dimension_numbers = #tpu.dot_dimension_numbers<[1], [0], [0], [1], [0, 0, 1, 1], [], []>} : vector<8x32xbf16>, vector<32x128xbf16>, vector<8x128xf32> -> vector<8x128xf32>
    %c0_3 = arith.constant 0 : index
    %c0_4 = arith.constant 0 : index
    %4 = vector.load %arg2[%c0_3, %c0_4] : memref<1x128xf32, #tpu.memory_space<vmem>>, vector<1x128xf32>
    %5 = vector.broadcast %4 : vector<1x128xf32> to vector<8x128xf32>
    %6 = arith.addf %3, %5 : vector<8x128xf32>
    %cst_5 = arith.constant 0.000000e+00 : f32
    %7 = vector.broadcast %cst_5 : f32 to vector<8x128xf32>
    %8 = arith.maximumf %6, %7 : vector<8x128xf32>
    %c0_6 = arith.constant 0 : index
    %c0_7 = arith.constant 0 : index
    %9 = vector.load %arg3[%c0_6, %c0_7] : memref<1x128xbf16, #tpu.memory_space<vmem>>, vector<1x128xbf16>
    %10 = arith.truncf %8 : vector<8x128xf32> to vector<8x128xbf16>
    %cst_8 = arith.constant dense<0.000000e+00> : vector<1x8xf32>
    %11 = tpu.matmul %9, %10, %cst_8 {dimension_numbers = #tpu.dot_dimension_numbers<[1], [1], [0], [0], [0, 0, 1, 0], [], []>} : vector<1x128xbf16>, vector<8x128xbf16>, vector<1x8xf32> -> vector<1x8xf32>
    %c0_9 = arith.constant 0 : index
    %12 = memref.load %arg4[%c0_9] : memref<1xf32, #tpu.memory_space<smem>>
    %13 = vector.broadcast %12 : f32 to vector<1x8xf32>
    %14 = arith.addf %11, %13 : vector<1x8xf32>
    %c0_10 = arith.constant 0 : index
    %c0_11 = arith.constant 0 : index
    %15 = vector.load %arg5[%c0_10, %c0_11] : memref<1x8xf32, #tpu.memory_space<vmem>>, vector<1x8xf32>
    tpu.vector_store %arg5[%c0_10, %c0_11], %14 {strides = array<i32>} : memref<1x8xf32, #tpu.memory_space<vmem>>, vector<1x8xf32>,
    return
  }
}

</mosaic_0001>

<llo_original>
// kernel: tpu_custom_call.1
$region0: #{tpu_custom_call.1}
  #allocation0 [shape = 'u32[]', space=smem, size = 0x4, offset = 0x4, fixed_abs, tag = 'smem constant byte address 0x4 - core index']
  #allocation1 [shape = 'u32[144,128]{1,0:T(1,128)}', space=vmem, size = 0x12000, scoped, tag = 'internal scratch']
  #allocation2 [shape = 'f32[1]{0:T(128)S(6)}', space=smem, size = 0x200, scoped, tag = 'scoped memory for tpu_custom_call.1']
  %s0 = inlined_call_operand.hbm [shape: f32[8,32], index: 0, kind: input, shape index: {}]
  %s1 = inlined_call_operand.hbm [shape: bf16[32,128], index: 1, kind: input, shape index: {}]
  %s2 = inlined_call_operand.vmem [shape: f32[1,128], index: 2, kind: input, shape index: {}]
  %s3 = inlined_call_operand.vmem [shape: bf16[1,128], index: 3, kind: input, shape index: {}]
  %s4 = inlined_call_operand.<no memory space> [shape: f32[1], index: 4, kind: input, shape index: {}]
  %s5 = inlined_call_operand.hbm [shape: f32[1,8], index: 5, kind: output, shape index: {}]
  %s6 = sld [smem:[#allocation0]]
  $region38: #{tpu_custom_call.1} parent=0
    _
  %s8 = ssub.s32 1, %s6
  %s9 = scalar_select 0, %s8, %s6
  %10 = sst [smem:[#allocation2]] %s4
  $region1: #{tpu_custom_call.1} parent=0
    #allocation3 [shape = 'u8[4096]{0}', space=vmem, size = 0x1000, scoped, tag = 'input window, operand 0, single buffered']
    #allocation4 [shape = 's32[1]{0}', space=sflag, size = 0x4, scoped, tag = 'scoped memory for tpu_custom_call.1']
    #allocation5 [shape = 's32[1]{0}', space=sflag, size = 0x4, scoped, tag = 'scoped memory for tpu_custom_call.1']
    #allocation6 [shape = 'u8[8192]{0}', space=vmem, size = 0x2000, scoped, tag = 'input window, operand 1, single buffered']
    #allocation7 [shape = 's32[1]{0}', space=sflag, size = 0x4, scoped, tag = 'scoped memory for tpu_custom_call.1']
    #allocation8 [shape = 'u8[512]{0}', space=vmem, size = 0x400, scoped, tag = 'output window, operand 0, single buffered']
    %11 = vsyncpa [#allocation4], 0
    %12 = vsyncpa [#allocation7], 0
    %13 = vsyncpa [#allocation5], 0
    // Predicated region
    $region2: #{tpu_custom_call.1} parent=1 // pred_check
      _
    $region3: #{tpu_custom_call.1} parent=1 // pred_check_branch
      %15 = sbr.rel (0) target = $region5
    $region4: #{tpu_custom_call.1} parent=1 // pred_region
      %s17 = ssub.s32 128, 128
      %18 = vsyncadd [#allocation4], %s17
      %s20 = sshll.u32 [#allocation3], 4
      %s21 = int_to_ptr.vmem [resolvable:$true] %s20
      %23 = dma.hbm_to_vmem [thread:$0]  %s0, 128, %s21, [#allocation4]
    $region5: #{tpu_custom_call.1} parent=1 // pred_fallthru
      _
    // Predicated region
    $region6: #{tpu_custom_call.1} parent=1 // pred_check
      _
    $region7: #{tpu_custom_call.1} parent=1 // pred_check_branch
      %25 = sbr.rel (0) target = $region9
    $region8: #{tpu_custom_call.1} parent=1 // pred_region
      %s27 = ssub.s32 256, 256
      %28 = vsyncadd [#allocation7], %s27
      %s29 = sshll.u32 [#allocation6], 4
      %s30 = int_to_ptr.vmem [resolvable:$true] %s29
      %35 = dma.hbm_to_vmem [thread:$0]  %s1, 256, %s30, [#allocation7], 64, 64, 4
    $region9: #{tpu_custom_call.1} parent=1 // pred_fallthru
      _
    // Predicated region
    $region10: #{tpu_custom_call.1} parent=1 // pred_check
      _
    $region11: #{tpu_custom_call.1} parent=1 // pred_check_branch
      %37 = sbr.rel (0) target = $region13
    $region12: #{tpu_custom_call.1} parent=1 // pred_region
      _
    $region13: #{tpu_custom_call.1} parent=1 // pred_fallthru
      _
    // Predicated region
    $region14: #{tpu_custom_call.1} parent=1 // pred_check
      _
    $region15: #{tpu_custom_call.1} parent=1 // pred_check_branch
      %39 = sbr.rel (0) target = $region17
    $region16: #{tpu_custom_call.1} parent=1 // pred_region
      _
    $region17: #{tpu_custom_call.1} parent=1 // pred_fallthru
      _
    // Predicated region
    $region18: #{tpu_custom_call.1} parent=1 // pred_check
      _
    $region19: #{tpu_custom_call.1} parent=1 // pred_check_branch
      %41 = sbr.rel (0) target = $region21
    $region20: #{tpu_custom_call.1} parent=1 // pred_region
      _
    $region21: #{tpu_custom_call.1} parent=1 // pred_fallthru
      _
    // Predicated region
    $region22: #{tpu_custom_call.1} parent=1 // pred_check
      _
    $region23: #{tpu_custom_call.1} parent=1 // pred_check_branch
      %43 = sbr.rel (0) target = $region25
    $region24: #{tpu_custom_call.1} parent=1 // pred_region
      %44 = dma.done [#allocation4], 128
    $region25: #{tpu_custom_call.1} parent=1 // pred_fallthru
      _
    // Predicated region
    $region26: #{tpu_custom_call.1} parent=1 // pred_check
      _
    $region27: #{tpu_custom_call.1} parent=1 // pred_check_branch
      %46 = sbr.rel (0) target = $region29
    $region28: #{tpu_custom_call.1} parent=1 // pred_region
      %47 = dma.done [#allocation7], 256
    $region29: #{tpu_custom_call.1} parent=1 // pred_fallthru
      _
    %v49 = vld [vmem:[#allocation6] sm:$0xf]
    %v50 = vld [vmem:[#allocation6 + $0x4] sm:$0xf]
    %v51 = vld [vmem:[#allocation6 + $0x8] sm:$0xf]
    %v52 = vld [vmem:[#allocation6 + $0xc] sm:$0xf]
    %v53 = vld [vmem:[#allocation3] sm:$0xff]
    %v54 = vpack.c.bf16 %v53, %v53
    %v55 = vld [vmem:[%s2] sm:$0x1]
    %v57 = vlaneseq
    %v58 = vshrl.u32 %v57, 7
    %v59 = vsub.s32 0, %v58
    %v60 = vrot.slane %v55, %v59
    %v66 = vunpack.c.l.b16 %v49
    %v67 = vunpack.c.l.b16 %v50
    %v68 = vunpack.c.l.b16 %v51
    %v69 = vunpack.c.l.b16 %v52
    %v70 = vpack.c.b16 %v67, %v66
    %v71 = vpack.c.b16 %v69, %v68
    %vm74 = vcmask 261120
    %v76 = vsel %vm74, %v54, 0
    %78 = vmatprep.subr.bf16.mxu0 0
    %79 = vmatpush1.bf16.msra.mxu0 %v70
    %80 = vmatprep.subr.bf16.mxu0 0
    %81 = vmatpush1.bf16.msra.mxu0 %v71
    %82 = vmatprep.subr.bf16.mxu0 0
    %83 = vmatpush1.bf16.msra.mxu0 0
    %84 = vmatprep.subr.bf16.mxu0 0
    %85 = vmatpush1.bf16.msra.mxu0 0
    %86 = vmatprep.subr.bf16.mxu0 0
    %87 = vmatpush1.bf16.msra.mxu0 0
    %88 = vmatprep.subr.bf16.mxu0 0
    %89 = vmatpush1.bf16.msra.mxu0 0
    %90 = vmatprep.subr.bf16.mxu0 0
    %91 = vmatpush1.bf16.msra.mxu0 0
    %92 = vmatprep.subr.bf16.mxu0 0
    %93 = vmatpush1.bf16.msra.mxu0 0
    %94 = vmatprep.subr.bf16.mxu0 0
    %95 = vmatpush1.bf16.msra.mxu0 0
    %96 = vmatprep.subr.bf16.mxu0 0
    %97 = vmatpush1.bf16.msra.mxu0 0
    %98 = vmatprep.subr.bf16.mxu0 0
    %99 = vmatpush1.bf16.msra.mxu0 0
    %100 = vmatprep.subr.bf16.mxu0 0
    %101 = vmatpush1.bf16.msra.mxu0 0
    %102 = vmatprep.subr.bf16.mxu0 0
    %103 = vmatpush1.bf16.msra.mxu0 0
    %104 = vmatprep.subr.bf16.mxu0 0
    %105 = vmatpush1.bf16.msra.mxu0 0
    %106 = vmatprep.subr.bf16.mxu0 0
    %107 = vmatpush1.bf16.msra.mxu0 0
    %108 = vmatprep.subr.bf16.mxu0 0
    %109 = vmatpush1.bf16.msra.mxu0 0
    %110 = vmatprep.mubr.bf16.mxu0 0
    %111 = vmatmul.mubr.bf16.gmra.mrb[0].mxu0 %v76
    %v112 = vpop.f32.mrb[0].mxu0
    %v113 = vadd.f32 %v60, %v112
    %v114 = vpop.f32.mrb[0].mxu0
    %v115 = vpop.f32.mrb[0].mxu0
    %v116 = vpop.f32.mrb[0].mxu0
    %117 = vdwg.mxu0
    %v118 = vmax.f32 %v113, 0.0
    %v119 = vld [vmem:[%s3] sm:$0x1]
    %v120 = vpack.c.bf16 %v118, %v118
    %s121 = sld [smem:[#allocation2]]
    %v122 = vstv %s121
    %123 = vmatprep.subr.bf16.mxu0 0
    %124 = vmatpush1.bf16.xpose.msra.mxu0 %v120
    %125 = vmatprep.subr.bf16.mxu0 0
    %126 = vmatpush1.bf16.xpose.msra.mxu0 0
    %127 = vmatprep.subr.bf16.mxu0 0
    %128 = vmatpush1.bf16.xpose.msra.mxu0 0
    %129 = vmatprep.subr.bf16.mxu0 0
    %130 = vmatpush1.bf16.xpose.msra.mxu0 0
    %131 = vmatprep.subr.bf16.mxu0 0
    %132 = vmatpush1.bf16.xpose.msra.mxu0 0
    %133 = vmatprep.subr.bf16.mxu0 0
    %134 = vmatpush1.bf16.xpose.msra.mxu0 0
    %135 = vmatprep.subr.bf16.mxu0 0
    %136 = vmatpush1.bf16.xpose.msra.mxu0 0
    %137 = vmatprep.subr.bf16.mxu0 0
    %138 = vmatpush1.bf16.xpose.msra.mxu0 0
    %139 = vmatprep.subr.bf16.mxu0 0
    %140 = vmatpush1.bf16.xpose.msra.mxu0 0
    %141 = vmatprep.subr.bf16.mxu0 0
    %142 = vmatpush1.bf16.xpose.msra.mxu0 0
    %143 = vmatprep.subr.bf16.mxu0 0
    %144 = vmatpush1.bf16.xpose.msra.mxu0 0
    %145 = vmatprep.subr.bf16.mxu0 0
    %146 = vmatpush1.bf16.xpose.msra.mxu0 0
    %147 = vmatprep.subr.bf16.mxu0 0
    %148 = vmatpush1.bf16.xpose.msra.mxu0 0
    %149 = vmatprep.subr.bf16.mxu0 0
    %150 = vmatpush1.bf16.xpose.msra.mxu0 0
    %151 = vmatprep.subr.bf16.mxu0 0
    %152 = vmatpush1.bf16.xpose.msra.mxu0 0
    %153 = vmatprep.subr.bf16.mxu0 0
    %154 = vmatpush1.bf16.xpose.msra.mxu0 0
    %155 = vmatprep.mubr.bf16.mxu0 0
    %156 = vmatmul.mubr.bf16.gmra.mrb[0].mxu0 %v119
    %v157 = vpop.f32.mrb[0].mxu0
    %v158 = vadd.f32 %v122, %v157
    %v159 = vpop.f32.mrb[0].mxu0
    %v160 = vpop.f32.mrb[0].mxu0
    %v161 = vpop.f32.mrb[0].mxu0
    %162 = vdwg.mxu0
    %vm163 = vcmask 57344
    %164 = vst.msk [vmem:[#allocation8] sm:$0x1] %vm163, %v158
    // Predicated region
    $region30: #{tpu_custom_call.1} parent=1 // pred_check
      _
    $region31: #{tpu_custom_call.1} parent=1 // pred_check_branch
      %166 = sbr.rel (0) target = $region33
    $region32: #{tpu_custom_call.1} parent=1 // pred_region
      %s168 = ssub.s32 16, 16
      %169 = vsyncadd [#allocation5], %s168
      %s171 = sshll.u32 [#allocation8], 4
      %s172 = int_to_ptr.vmem [resolvable:$true] %s171
      %174 = dma.vmem_to_hbm [thread:$0]  %s172, 16, %s5, [#allocation5]
    $region33: #{tpu_custom_call.1} parent=1 // pred_fallthru
      _
    // Predicated region
    $region34: #{tpu_custom_call.1} parent=1 // pred_check
      _
    $region35: #{tpu_custom_call.1} parent=1 // pred_check_branch
      %176 = sbr.rel (0) target = $region37
    $region36: #{tpu_custom_call.1} parent=1 // pred_region
      %177 = dma.done [#allocation5], 16
    $region37: #{tpu_custom_call.1} parent=1 // pred_fallthru
      _
    %178 = vsyncpa [#allocation4], 1
    %179 = vsyncpa [#allocation7], 1
    %180 = vsyncpa [#allocation5], 1

</llo_original>
